<compile_context>
chip_gen: v7x
topology: tpu7x:2x2x1
jax: 0.10.0
libtpu: 0.0.40
codegen_flags: <defaults>
</compile_context>

<pallas_src>
import functools

import jax
import jax.numpy as jnp
import numpy as np
from jax.experimental import pallas as pl
from jax.experimental.pallas import tpu as pltpu


# ----------------------------------------------------------------------------
# VMEM-aware tiling helpers
# ----------------------------------------------------------------------------
def _round_up(x, m):
    return ((x + m - 1) // m) * m


def _physical_vmem_bytes():
    """Per-TensorCore VMEM capacity; conservative (v7x = 64 MiB) fallback."""
    try:
        return int(pltpu.get_tpu_info().vmem_capacity_bytes)
    except Exception:
        return 64 << 20


def _min_block_rows(dtype):
    """Smallest efficient sublane multiple: 8 for f32, 16 for bf16, 32 for i8."""
    return max(8, 32 // jnp.dtype(dtype).itemsize)


def _pick_block_rows(total_rows, row_vmem_bytes, min_rows, tile_budget_bytes):
    """VMEM-aware row-tile size.

    * big enough to amortize the ~0.35 us per-grid-step overhead,
    * small enough that the 4 pipeline tiles (double-buffered in + out) stay
      inside the per-generation VMEM budget,
    * a multiple of the dtype sublane count (or the full extent),
    * and, when possible, small enough that the grid has >= 2 steps so the
      "parallel" axis can shard across v7x's 2 TensorCores.
    """
    if total_rows <= min_rows:
        return total_rows                                  # one full-extent block
    rows = (tile_budget_bytes // row_vmem_bytes) // min_rows * min_rows
    rows = max(rows, min_rows)                             # never below sublane min
    half = -(-total_rows // 2)                             # ceil(total/2)
    half = _round_up(half, min_rows)                       # keep >= 2 grid steps
    rows = min(rows, half)
    return total_rows if rows >= total_rows else rows


# ----------------------------------------------------------------------------
# Pallas scaffold kernel
# ----------------------------------------------------------------------------
def _base_loss_scaffold_kernel(logits_ref, out_ref):
    """Scaffold for a concrete loss forward pass.

    A subclass would put its loss math here:
      * row-wise softmax / CE in f32 (f32 VMEM scratch accumulators,
        preferred_element_type=jnp.float32), exp / reciprocal routed to the EUP
        (pl.reciprocal(..., approx=True)), row max/sum reductions to the XLU,
      * target-class gathers driven by SMEM-resident labels (cheap scalar
        reads) rather than one-hot matmuls (small NUM_CLASSES starves the MXU),
      * a lane-dense f32 scratch accumulator for the per-row loss (e.g.
        [tb, 128] reduced at the end), not narrow [tb, 1] partial stores.

    The abstract base class defines no math, so this kernel is an identity
    pass-through over the (lane-dense) logits tile, which is aliased to the
    output buffer.
    """
    # TODO(synk): BaseLossFunction.forward is abstract (raises
    # NotImplementedError); there is no loss computation to translate, so this
    # body is a placeholder for concrete subclasses.
    out_ref[...] = logits_ref[...]


@functools.partial(jax.jit, donate_argnums=(0,))
def _base_loss_scaffold_call(logits2d):
    rows, cols = logits2d.shape
    itemsize = jnp.dtype(logits2d.dtype).itemsize

    phys_vmem = _physical_vmem_bytes()
    # Total pipeline budget:
    #   v5e / v6e (128 MiB physical) -> 80 MiB  (well above the 16/32 MiB
    #                                            default scoped limit)
    #   v7x       ( 64 MiB physical) -> 48 MiB  (leaves headroom on the only
    #                                            generation with 64 MiB VMEM)
    total_budget = min(phys_vmem * 3 // 4, 80 << 20)
    # 4 resident tiles: double-buffered input + double-buffered output.
    tile_budget = total_budget // 4

    min_rows = _min_block_rows(logits2d.dtype)
    row_bytes = _round_up(cols, 128) * itemsize            # lane-padded VMEM row
    tr = _pick_block_rows(rows, row_bytes, min_rows, tile_budget)

    vmem_limit = int(min(phys_vmem, max(total_budget, 32 << 20)))

    return pl.pallas_call(
        _base_loss_scaffold_kernel,
        out_shape=jax.ShapeDtypeStruct((rows, cols), logits2d.dtype),
        grid=(pl.cdiv(rows, tr),),
        in_specs=[pl.BlockSpec((tr, cols), lambda i: (i, 0))],
        out_specs=pl.BlockSpec((tr, cols), lambda i: (i, 0)),
        # Logits (operand 0) alias the output: the identity pass-through needs
        # no extra HBM output buffer.  Drop the alias if a subclass stops
        # overwriting logits in place.
        input_output_aliases={0: 0},
        compiler_params=pltpu.CompilerParams(
            dimension_semantics=("parallel",),
            vmem_limit_bytes=vmem_limit),
    )(logits2d)


def base_loss_scaffold(x_nchw, logits, labels, *, run_kernel=False):
    """Forward scaffold for BaseLossFunction.

    By default (the abstract base class) this is a pure pass-through with NO
    Pallas launch: aliasing does not remove the 2x|logits| HBM read+write of a
    streaming identity kernel, so skipping the launch is strictly cheaper.
    Set run_kernel=True (as a concrete subclass's real loss kernel would) to
    push the logits through the Pallas scaffold.

    `x_nchw` is accepted for signature parity with forward(input, output,
    label) but is deliberately NOT staged through the kernel: the base class
    never reads it, and DMAing a full NCHW image batch into VMEM is wasted HBM
    bandwidth (and a VMEM OOM at realistic batch sizes).
    """
    del x_nchw
    # TODO(synk): concrete subclasses that need the labels should pass them
    # either as a per-grid-step SMEM tile
    #   pl.BlockSpec((tb,), lambda i: (i,), memory_space=pltpu.MemorySpace.SMEM)
    # or via pltpu.PrefetchScalarGridSpec(num_scalar_prefetch=1) if index_maps
    # need them; the whole vector must NOT be kept as one untiled SMEM operand.
    del labels

    if not run_kernel:
        return logits

    b, num_classes = logits.shape
    total = b * num_classes
    if total % 128 == 0:
        # Lane-dense relayout: [B, C] -> [B*C/128, 128].  Pure layout change,
        # valid for the identity / elementwise scaffold; turns masked vst.msk
        # partial stores (C < 128) into full-lane stores and cuts VMEM / HBM
        # padding traffic 8x for C = 16.
        flat = logits.reshape(total // 128, 128)
        out = _base_loss_scaffold_call(flat)
        return out.reshape(b, num_classes)
    # Fallback: not reshapeable to lane-dense rows; tile the batch dim with the
    # full (lane-padded) class row.
    return _base_loss_scaffold_call(logits)


# ----------------------------------------------------------------------------
# Module translation
# ----------------------------------------------------------------------------
class BaseLossFunction:
    """JAX translation of the PyTorch BaseLossFunction (abstract base class).

    No parameters in __init__; forward raises NotImplementedError exactly as
    the reference module does.
    """

    def __init__(self):
        pass  # reference __init__ registers no parameters / buffers

    def forward(self, input, output, label):
        raise NotImplementedError('forward method should be implemented')

    def __call__(self, input, output, label):
        return self.forward(input, output, label)


if __name__ == "__main__":
    key = jax.random.PRNGKey(0)
    k1, k2, k3 = jax.random.split(key, 3)

    # Small deterministic example inputs consistent with a classification loss:
    #   input  : NCHW image batch fed to the network (never read by the base class)
    #   output : network logits  [B, NUM_CLASSES]
    #   label  : integer class labels [B]
    B, C = 8, 16
    x = jax.random.normal(k1, (B, 4, 16, 16), dtype=jnp.float32)     # NCHW
    logits = jax.random.normal(k2, (B, C), dtype=jnp.float32)        # [B, NUM_CLASSES]
    labels = jax.random.randint(k3, (B,), 0, C, dtype=jnp.int32)     # [B]

    # 1) Exact forward semantics of the abstract base class.
    loss_fn = BaseLossFunction()
    raised = False
    try:
        loss_fn(x, logits, labels)
    except NotImplementedError:
        raised = True
    assert raised, "BaseLossFunction.forward must raise NotImplementedError"

    # Snapshot expected values to host before the kernel donates/aliases logits.
    expected = np.asarray(logits)

    # 2) Default (abstract) path: no Pallas launch at all, logits returned as-is.
    passthrough = base_loss_scaffold(x, logits, labels)
    assert passthrough is logits

    # 3) Run the Pallas scaffold kernel once (as a concrete subclass would) and
    #    block on the result.
    result = base_loss_scaffold(x, logits, labels, run_kernel=True)
    result = jax.block_until_ready(result)
    assert result.shape == expected.shape and result.dtype == jnp.float32
    assert np.allclose(np.asarray(result), expected)

    print("KERNEL_OK")
</pallas_src>

<mosaic_0001>
module attributes {stable_mosaic.version = 11 : i64} {
  func.func @_base_loss_scaffold_kernel(%arg0: i32, %arg1: memref<1x128xf32, #tpu.memory_space<vmem>>, %arg2: memref<1x128xf32, #tpu.memory_space<vmem>>) attributes {dimension_semantics = [#tpu.dimension_semantics<parallel>], iteration_bounds = array<i64: 1>, scalar_prefetch = 0 : i64, scratch_operands = 0 : i64, tpu.core_type = #tpu.core_type<tc>, window_params = [{transform_indices = @transform_0, window_bounds = array<i64: 1, 128>}, {transform_indices = @transform_1, window_bounds = array<i64: 1, 128>}]} {
    %c0 = arith.constant 0 : index
    %c0_0 = arith.constant 0 : index
    %0 = vector.load %arg1[%c0, %c0_0] : memref<1x128xf32, #tpu.memory_space<vmem>>, vector<1x128xf32>
    %c0_1 = arith.constant 0 : index
    %c0_2 = arith.constant 0 : index
    %1 = vector.load %arg2[%c0_1, %c0_2] : memref<1x128xf32, #tpu.memory_space<vmem>>, vector<1x128xf32>
    tpu.vector_store %arg2[%c0_1, %c0_2], %0 {strides = array<i32>} : memref<1x128xf32, #tpu.memory_space<vmem>>, vector<1x128xf32>,
    return
  }
  func.func @transform_0(%arg0: i32) -> (i32, i32) {
    %c0_i32 = arith.constant 0 : i32
    %c0_i32_0 = arith.constant 0 : i32
    return %arg0, %c0_i32 : i32, i32
  }
  func.func @transform_1(%arg0: i32) -> (i32, i32) {
    %c0_i32 = arith.constant 0 : i32
    %c0_i32_0 = arith.constant 0 : i32
    return %arg0, %c0_i32 : i32, i32
  }
}

</mosaic_0001>

<llo_original>
// kernel: _base_loss_scaffold_call.1
$region0: #{_base_loss_scaffold_call.1}
  #allocation0 [shape = 'u32[]', space=smem, size = 0x4, offset = 0x4, fixed_abs, tag = 'smem constant byte address 0x4 - core index']
  #allocation1 [shape = 'u32[144,128]{1,0:T(1,128)}', space=vmem, size = 0x12000, scoped, tag = 'internal scratch']
  %s0 = inlined_call_operand.hbm [shape: f32[1,128], index: 0, kind: input, shape index: {}, may-alias: {0,1}]
  %s1 = inlined_call_operand.hbm [shape: f32[1,128], index: 1, kind: output, shape index: {}, may-alias: {0,1}]
  %s2 = sld [smem:[#allocation0]]
  $region18: #{_base_loss_scaffold_call.1} parent=0
    _
  %s4 = ssub.s32 1, %s2
  %s5 = scalar_select 0, %s4, %s2
  $region1: #{_base_loss_scaffold_call.1} parent=0
    #allocation2 [shape = 'u8[512]{0}', space=vmem, size = 0x400, scoped, tag = 'input window, operand 0, single buffered']
    #allocation3 [shape = 's32[1]{0}', space=sflag, size = 0x4, scoped, tag = 'scoped memory for _base_loss_scaffold_call.1']
    #allocation4 [shape = 's32[1]{0}', space=sflag, size = 0x4, scoped, tag = 'scoped memory for _base_loss_scaffold_call.1']
    #allocation5 [shape = 'u8[512]{0}', space=vmem, size = 0x400, scoped, tag = 'output window, operand 0, single buffered']
    %6 = vsyncpa [#allocation3], 0
    %7 = vsyncpa [#allocation4], 0
    // Predicated region
    $region2: #{_base_loss_scaffold_call.1} parent=1 // pred_check
      _
    $region3: #{_base_loss_scaffold_call.1} parent=1 // pred_check_branch
      %9 = sbr.rel (0) target = $region5
    $region4: #{_base_loss_scaffold_call.1} parent=1 // pred_region
      %s11 = ssub.s32 16, 16
      %12 = vsyncadd [#allocation3], %s11
      %s14 = sshll.u32 [#allocation2], 4
      %s15 = int_to_ptr.vmem [resolvable:$true] %s14
      %17 = dma.hbm_to_vmem [thread:$0]  %s0, 16, %s15, [#allocation3]
    $region5: #{_base_loss_scaffold_call.1} parent=1 // pred_fallthru
      _
    // Predicated region
    $region6: #{_base_loss_scaffold_call.1} parent=1 // pred_check
      _
    $region7: #{_base_loss_scaffold_call.1} parent=1 // pred_check_branch
      %19 = sbr.rel (0) target = $region9
    $region8: #{_base_loss_scaffold_call.1} parent=1 // pred_region
      %20 = dma.done [#allocation3], 16
    $region9: #{_base_loss_scaffold_call.1} parent=1 // pred_fallthru
      _
    %v21 = vld [vmem:[#allocation2] sm:$0x1]
    %22 = vst [vmem:[#allocation5] sm:$0x1] %v21
    // Predicated region
    $region10: #{_base_loss_scaffold_call.1} parent=1 // pred_check
      _
    $region11: #{_base_loss_scaffold_call.1} parent=1 // pred_check_branch
      %24 = sbr.rel (0) target = $region13
    $region12: #{_base_loss_scaffold_call.1} parent=1 // pred_region
      %s26 = ssub.s32 16, 16
      %27 = vsyncadd [#allocation4], %s26
      %s29 = sshll.u32 [#allocation5], 4
      %s30 = int_to_ptr.vmem [resolvable:$true] %s29
      %32 = dma.vmem_to_hbm [thread:$0]  %s30, 16, %s1, [#allocation4]
    $region13: #{_base_loss_scaffold_call.1} parent=1 // pred_fallthru
      _
    // Predicated region
    $region14: #{_base_loss_scaffold_call.1} parent=1 // pred_check
      _
    $region15: #{_base_loss_scaffold_call.1} parent=1 // pred_check_branch
      %34 = sbr.rel (0) target = $region17
    $region16: #{_base_loss_scaffold_call.1} parent=1 // pred_region
      %35 = dma.done [#allocation4], 16
    $region17: #{_base_loss_scaffold_call.1} parent=1 // pred_fallthru
      _
    %36 = vsyncpa [#allocation3], 1
    %37 = vsyncpa [#allocation4], 1

</llo_original>
